<compile_context>
chip_gen: v7x
topology: tpu7x:2x2x1
jax: 0.10.0
libtpu: 0.0.40
codegen_flags: <defaults>
</compile_context>

<pallas_src>
import jax
import jax.numpy as jnp
from jax.experimental import pallas as pl
from jax.experimental.pallas import tpu as pltpu


def _round_up(x, m):
    return (x + m - 1) // m * m


def _center_loss_kernel(label_ref, feat_ref, w_ref, part_ref):
    lbl = label_ref[...]                       # (TB, 1)  i32, -1 marks padded rows
    w = w_ref[...]                             # (Cp, Dp) f32 resident class centers

    tb, dp = feat_ref.shape
    cp = w.shape[0]

    # one-hot(label) on the VPU; padded rows (-1) never match -> all-zero rows.
    class_ids = jax.lax.broadcasted_iota(jnp.int32, (tb, cp), 1)
    onehot = (class_ids == lbl).astype(jnp.float32)                     # (TB, Cp)

    # gather-as-matmul on the MXU: centers[i] == weight[label[i]].
    # one-hot entries are exactly 0/1; HIGHEST precision keeps full f32 accuracy.
    centers = jnp.dot(onehot, w,
                      preferred_element_type=jnp.float32,
                      precision=jax.lax.Precision.HIGHEST)              # (TB, Dp)

    # (8, Dp) partial sum of squares: sublane-aligned chunked adds (pure VPU, no
    # XLU reduce in the hot loop); diff is never materialized as a full tile.
    part = jnp.zeros((8, dp), jnp.float32)
    for r in range(tb // 8):
        d = feat_ref[pl.ds(r * 8, 8), :] - centers[r * 8:(r + 1) * 8, :]
        part = part + d * d
    part_ref[...] = part


def center_loss(feat, label, weight, lambda_c, *, max_tile_rows=512):
    """feat: (B, D), label: (B,) int, weight: (C, D) -> scalar f32 loss."""
    B, D = feat.shape
    C, Dw = weight.shape
    assert D == Dw

    Dp = _round_up(max(D, 128), 128)          # lane-dense feature dim
    Cp = _round_up(max(C, 128), 128)          # lane-dense class dim (for one-hot)

    # Tile sizing against a conservative scoped-VMEM budget (v7x: 64 MiB physical).
    budget = 32 * 2 ** 20
    weight_bytes = 2 * Cp * Dp * 4                       # worst-case double-buffered
    per_row_bytes = 4 * (4 * Dp + Cp + 4)                # feat(x2 buf) + centers + onehot + misc
    avail = max(budget - weight_bytes, 8 * per_row_bytes)
    tb_cap = max(8, (avail // per_row_bytes) // 8 * 8)
    TB = int(min(max_tile_rows, tb_cap, _round_up(B, 8)))
    # TODO(synk): chunk the class axis (extra 'arbitrary' grid dim + centers scratch)
    # once the resident weight alone (Cp*Dp*4 bytes) no longer fits v7x's 64 MiB VMEM.

    Bp = _round_up(B, TB)
    num_tiles = Bp // TB

    feat = feat.astype(jnp.float32)
    weight = weight.astype(jnp.float32)
    label = label.astype(jnp.int32)

    # Zero-pad only when needed (numerically inert); padded labels = -1.
    if (Bp, Dp) == (B, D):
        feat_p = feat
    else:
        feat_p = jnp.zeros((Bp, Dp), jnp.float32).at[:B, :D].set(feat)
    if (Cp, Dp) == (C, D):
        w_p = weight
    else:
        w_p = jnp.zeros((Cp, Dp), jnp.float32).at[:C, :D].set(weight)
    lbl_p = jnp.full((Bp, 1), -1, jnp.int32).at[:B, 0].set(label)

    vmem_needed = weight_bytes + TB * per_row_bytes + 2 * 8 * Dp * 4
    vmem_limit = int(min(64 * 2 ** 20, max(2 * vmem_needed, 16 * 2 ** 20)))

    partials = pl.pallas_call(
        _center_loss_kernel,
        out_shape=jax.ShapeDtypeStruct((num_tiles * 8, Dp), jnp.float32),
        grid=(num_tiles,),
        in_specs=[
            pl.BlockSpec((TB, 1), lambda i: (i, 0)),      # labels (per batch tile)
            pl.BlockSpec((TB, Dp), lambda i: (i, 0)),     # feature tile
            pl.BlockSpec((Cp, Dp), lambda i: (0, 0)),     # class centers, resident
        ],
        out_specs=pl.BlockSpec((8, Dp), lambda i: (i, 0)),
        compiler_params=pltpu.CompilerParams(
            dimension_semantics=("parallel",),            # independent tiles (v7x 2-TC)
            vmem_limit_bytes=vmem_limit),
    )(lbl_p, feat_p, w_p)

    # Tiny epilogue in JAX: single cross-lane reduce + sqrt + scale.
    dist = jnp.sqrt(jnp.sum(partials))
    return (lambda_c / 2.0 / B) * dist


def center_loss_ref(feat, label, weight, lambda_c):
    centers = weight[label]
    dist = jnp.sqrt(jnp.sum((feat - centers) ** 2))
    return lambda_c / 2.0 / feat.shape[0] * dist


if __name__ == "__main__":
    # Deterministic synthetic inputs matching the module (weight ~ randn(C, D)).
    feat_dim = 32
    num_classes = 10
    lambda_c = 0.5
    batch = 8

    key = jax.random.PRNGKey(0)
    k_w, k_f, k_l = jax.random.split(key, 3)
    weight = jax.random.normal(k_w, (num_classes, feat_dim), dtype=jnp.float32)
    feat = jax.random.normal(k_f, (batch, feat_dim), dtype=jnp.float32)
    label = jax.random.randint(k_l, (batch,), 0, num_classes, dtype=jnp.int32)

    loss = center_loss(feat, label, weight, lambda_c)
    jax.block_until_ready(loss)

    ref = center_loss_ref(feat, label, weight, lambda_c)
    assert jnp.allclose(loss, ref, rtol=1e-5, atol=1e-5), (loss, ref)

    print("KERNEL_OK")
</pallas_src>

<mosaic_0001>
module attributes {stable_mosaic.version = 11 : i64} {
  func.func @_center_loss_kernel(%arg0: i32, %arg1: memref<8x1xi32, #tpu.memory_space<vmem>>, %arg2: memref<8x128xf32, #tpu.memory_space<vmem>>, %arg3: memref<128x128xf32, #tpu.memory_space<vmem>>, %arg4: memref<8x128xf32, #tpu.memory_space<vmem>>) attributes {dimension_semantics = [#tpu.dimension_semantics<parallel>], iteration_bounds = array<i64: 1>, scalar_prefetch = 0 : i64, scratch_operands = 0 : i64, tpu.core_type = #tpu.core_type<tc>, window_params = [{transform_indices = @transform_0, window_bounds = array<i64: 8, 1>}, {transform_indices = @transform_1, window_bounds = array<i64: 8, 128>}, {pipeline_mode = #tpu.pipeline_mode<synchronous>, transform_indices = @transform_2, window_bounds = array<i64: 128, 128>}, {transform_indices = @transform_3, window_bounds = array<i64: 8, 128>}]} {
    %c0 = arith.constant 0 : index
    %c0_0 = arith.constant 0 : index
    %0 = vector.load %arg1[%c0, %c0_0] : memref<8x1xi32, #tpu.memory_space<vmem>>, vector<8x1xi32>
    %c0_1 = arith.constant 0 : index
    %c0_2 = arith.constant 0 : index
    %1 = vector.load %arg3[%c0_1, %c0_2] : memref<128x128xf32, #tpu.memory_space<vmem>>, vector<128x128xf32>
    %2 = tpu.iota {dimensions = array<i32: 1>} : vector<8x128xi32>
    %3 = vector.broadcast %0 : vector<8x1xi32> to vector<8x128xi32>
    %4 = arith.cmpi eq, %2, %3 : vector<8x128xi32>
    %5 = arith.extui %4 : vector<8x128xi1> to vector<8x128xi32>
    %6 = arith.sitofp %5 : vector<8x128xi32> to vector<8x128xf32>
    %cst = arith.constant dense<0.000000e+00> : vector<8x128xf32>
    %7 = tpu.matmul %6, %1, %cst {dimension_numbers = #tpu.dot_dimension_numbers<[1], [0], [0], [1], [0, 0, 1, 1], [], []>, precision = #tpu.contract_precision<fp32>} : vector<8x128xf32>, vector<128x128xf32>, vector<8x128xf32> -> vector<8x128xf32>
    %cst_3 = arith.constant 0.000000e+00 : f32
    %8 = vector.broadcast %cst_3 : f32 to vector<8x128xf32>
    %c0_4 = arith.constant 0 : index
    %c0_5 = arith.constant 0 : index
    %9 = vector.load %arg2[%c0_4, %c0_5] : memref<8x128xf32, #tpu.memory_space<vmem>>, vector<8x128xf32>
    %10 = arith.subf %9, %7 : vector<8x128xf32>
    %11 = arith.mulf %10, %10 : vector<8x128xf32>
    %12 = arith.addf %8, %11 : vector<8x128xf32>
    %c0_6 = arith.constant 0 : index
    %c0_7 = arith.constant 0 : index
    %13 = vector.load %arg4[%c0_6, %c0_7] : memref<8x128xf32, #tpu.memory_space<vmem>>, vector<8x128xf32>
    tpu.vector_store %arg4[%c0_6, %c0_7], %12 {strides = array<i32>} : memref<8x128xf32, #tpu.memory_space<vmem>>, vector<8x128xf32>,
    return
  }
  func.func @transform_0(%arg0: i32) -> (i32, i32) {
    %c0_i32 = arith.constant 0 : i32
    %c0_i32_0 = arith.constant 0 : i32
    return %arg0, %c0_i32 : i32, i32
  }
  func.func @transform_1(%arg0: i32) -> (i32, i32) {
    %c0_i32 = arith.constant 0 : i32
    %c0_i32_0 = arith.constant 0 : i32
    return %arg0, %c0_i32 : i32, i32
  }
  func.func @transform_2(%arg0: i32) -> (i32, i32) {
    %c0_i32 = arith.constant 0 : i32
    %c0_i32_0 = arith.constant 0 : i32
    %c0_i32_1 = arith.constant 0 : i32
    return %c0_i32, %c0_i32_0 : i32, i32
  }
  func.func @transform_3(%arg0: i32) -> (i32, i32) {
    %c0_i32 = arith.constant 0 : i32
    %c0_i32_0 = arith.constant 0 : i32
    return %arg0, %c0_i32 : i32, i32
  }
}

</mosaic_0001>

<llo_original>
// kernel: tpu_custom_call.1
$region0: #{tpu_custom_call.1}
  #allocation0 [shape = 'u32[]', space=smem, size = 0x4, offset = 0x4, fixed_abs, tag = 'smem constant byte address 0x4 - core index']
  #allocation1 [shape = 'u32[144,128]{1,0:T(1,128)}', space=vmem, size = 0x12000, scoped, tag = 'internal scratch']
  %s0 = inlined_call_operand.vmem [shape: s32[8,1], index: 0, kind: input, shape index: {}]
  %s1 = inlined_call_operand.vmem [shape: f32[8,128], index: 1, kind: input, shape index: {}]
  %s2 = inlined_call_operand.hbm [shape: f32[128,128], index: 2, kind: input, shape index: {}]
  %s3 = inlined_call_operand.hbm [shape: f32[8,128], index: 3, kind: output, shape index: {}]
  %s4 = sld [smem:[#allocation0]]
  $region26: #{tpu_custom_call.1} parent=0
    _
  %s6 = ssub.s32 1, %s4
  %s7 = scalar_select 0, %s6, %s4
  $region1: #{tpu_custom_call.1} parent=0
    #allocation2 [shape = 'u8[65536]{0}', space=vmem, size = 0x10000, scoped, tag = 'input window, operand 2, single buffered']
    #allocation3 [shape = 's32[1]{0}', space=sflag, size = 0x4, scoped, tag = 'scoped memory for tpu_custom_call.1']
    #allocation4 [shape = 's32[1]{0}', space=sflag, size = 0x4, scoped, tag = 'scoped memory for tpu_custom_call.1']
    #allocation5 [shape = 'u8[4096]{0}', space=vmem, size = 0x1000, scoped, tag = 'output window, operand 0, single buffered']
    %8 = vsyncpa [#allocation3], 0
    %9 = vsyncpa [#allocation4], 0
    // Predicated region
    $region2: #{tpu_custom_call.1} parent=1 // pred_check
      _
    $region3: #{tpu_custom_call.1} parent=1 // pred_check_branch
      %11 = sbr.rel (0) target = $region5
    $region4: #{tpu_custom_call.1} parent=1 // pred_region
      _
    $region5: #{tpu_custom_call.1} parent=1 // pred_fallthru
      _
    // Predicated region
    $region6: #{tpu_custom_call.1} parent=1 // pred_check
      _
    $region7: #{tpu_custom_call.1} parent=1 // pred_check_branch
      %13 = sbr.rel (0) target = $region9
    $region8: #{tpu_custom_call.1} parent=1 // pred_region
      _
    $region9: #{tpu_custom_call.1} parent=1 // pred_fallthru
      _
    // Predicated region
    $region10: #{tpu_custom_call.1} parent=1 // pred_check
      _
    $region11: #{tpu_custom_call.1} parent=1 // pred_check_branch
      %15 = sbr.rel (0) target = $region13
    $region12: #{tpu_custom_call.1} parent=1 // pred_region
      %s17 = ssub.s32 2048, 2048
      %18 = vsyncadd [#allocation3], %s17
      %s19 = sshll.u32 [#allocation2], 4
      %s20 = int_to_ptr.vmem [resolvable:$true] %s19
      %25 = dma.hbm_to_vmem [thread:$0]  %s2, 2048, %s20, [#allocation3], 128, 128, 8
    $region13: #{tpu_custom_call.1} parent=1 // pred_fallthru
      _
    // Predicated region
    $region14: #{tpu_custom_call.1} parent=1 // pred_check
      _
    $region15: #{tpu_custom_call.1} parent=1 // pred_check_branch
      %27 = sbr.rel (0) target = $region17
    $region16: #{tpu_custom_call.1} parent=1 // pred_region
      %28 = dma.done [#allocation3], 2048
    $region17: #{tpu_custom_call.1} parent=1 // pred_fallthru
      _
    %v29 = vld [vmem:[%s0] sm:$0xff]
    %v30 = vld [vmem:[#allocation2] sm:$0xff]
    %v31 = vld [vmem:[#allocation2 + $0x8] sm:$0xff]
    %v32 = vld [vmem:[#allocation2 + $0x10] sm:$0xff]
    %v33 = vld [vmem:[#allocation2 + $0x18] sm:$0xff]
    %v34 = vld [vmem:[#allocation2 + $0x20] sm:$0xff]
    %v35 = vld [vmem:[#allocation2 + $0x28] sm:$0xff]
    %v36 = vld [vmem:[#allocation2 + $0x30] sm:$0xff]
    %v37 = vld [vmem:[#allocation2 + $0x38] sm:$0xff]
    %v38 = vld [vmem:[#allocation2 + $0x40] sm:$0xff]
    %v39 = vld [vmem:[#allocation2 + $0x48] sm:$0xff]
    %v40 = vld [vmem:[#allocation2 + $0x50] sm:$0xff]
    %v41 = vld [vmem:[#allocation2 + $0x58] sm:$0xff]
    %v42 = vld [vmem:[#allocation2 + $0x60] sm:$0xff]
    %v43 = vld [vmem:[#allocation2 + $0x68] sm:$0xff]
    %v44 = vld [vmem:[#allocation2 + $0x70] sm:$0xff]
    %v45 = vld [vmem:[#allocation2 + $0x78] sm:$0xff]
    %v46 = vlaneseq
    %v47 = vand.u32 %v46, 127
    %48 = vset.pattern.permute.xlu0 0
    %49 = vperm.xlu0 %48, %v29
    %v50 = vpop.permute.xlu0 %49
    %vm51 = vcmp.eq.s32.totalorder %v47, %v50
    %v52 = vsel %vm51, 1, 0
    %v53 = vcvt.s32.f32 %v52
    %54 = vmatprep.subr.mxu0 0.0
    %v55 = vand.u32 %v30, 4294901760
    %56 = vmatpush1.msra.mxu0 %v55
    %57 = vmatprep.subr.mxu0 0.0
    %v58 = vand.u32 %v31, 4294901760
    %59 = vmatpush1.msra.mxu0 %v58
    %60 = vmatprep.subr.mxu0 0.0
    %v61 = vand.u32 %v32, 4294901760
    %62 = vmatpush1.msra.mxu0 %v61
    %63 = vmatprep.subr.mxu0 0.0
    %v64 = vand.u32 %v33, 4294901760
    %65 = vmatpush1.msra.mxu0 %v64
    %66 = vmatprep.subr.mxu0 0.0
    %v67 = vand.u32 %v34, 4294901760
    %68 = vmatpush1.msra.mxu0 %v67
    %69 = vmatprep.subr.mxu0 0.0
    %v70 = vand.u32 %v35, 4294901760
    %71 = vmatpush1.msra.mxu0 %v70
    %72 = vmatprep.subr.mxu0 0.0
    %v73 = vand.u32 %v36, 4294901760
    %74 = vmatpush1.msra.mxu0 %v73
    %75 = vmatprep.subr.mxu0 0.0
    %v76 = vand.u32 %v37, 4294901760
    %77 = vmatpush1.msra.mxu0 %v76
    %78 = vmatprep.subr.mxu0 0.0
    %v79 = vand.u32 %v38, 4294901760
    %80 = vmatpush1.msra.mxu0 %v79
    %81 = vmatprep.subr.mxu0 0.0
    %v82 = vand.u32 %v39, 4294901760
    %83 = vmatpush1.msra.mxu0 %v82
    %84 = vmatprep.subr.mxu0 0.0
    %v85 = vand.u32 %v40, 4294901760
    %86 = vmatpush1.msra.mxu0 %v85
    %87 = vmatprep.subr.mxu0 0.0
    %v88 = vand.u32 %v41, 4294901760
    %89 = vmatpush1.msra.mxu0 %v88
    %90 = vmatprep.subr.mxu0 0.0
    %v91 = vand.u32 %v42, 4294901760
    %92 = vmatpush1.msra.mxu0 %v91
    %93 = vmatprep.subr.mxu0 0.0
    %v94 = vand.u32 %v43, 4294901760
    %95 = vmatpush1.msra.mxu0 %v94
    %96 = vmatprep.subr.mxu0 0.0
    %v97 = vand.u32 %v44, 4294901760
    %98 = vmatpush1.msra.mxu0 %v97
    %99 = vmatprep.subr.mxu0 0.0
    %v100 = vand.u32 %v45, 4294901760
    %101 = vmatpush1.msra.mxu0 %v100
    %102 = vmatprep.subr.mxu0 0.0
    %103 = vmatpush1.msra.mxu0 0.0
    %104 = vmatprep.subr.mxu0 0.0
    %105 = vmatpush1.msra.mxu0 0.0
    %106 = vmatprep.subr.mxu0 0.0
    %107 = vmatpush1.msra.mxu0 0.0
    %108 = vmatprep.subr.mxu0 0.0
    %109 = vmatpush1.msra.mxu0 0.0
    %110 = vmatprep.subr.mxu0 0.0
    %111 = vmatpush1.msra.mxu0 0.0
    %112 = vmatprep.subr.mxu0 0.0
    %113 = vmatpush1.msra.mxu0 0.0
    %114 = vmatprep.subr.mxu0 0.0
    %115 = vmatpush1.msra.mxu0 0.0
    %116 = vmatprep.subr.mxu0 0.0
    %117 = vmatpush1.msra.mxu0 0.0
    %118 = vmatprep.subr.mxu0 0.0
    %119 = vmatpush1.msra.mxu0 0.0
    %120 = vmatprep.subr.mxu0 0.0
    %121 = vmatpush1.msra.mxu0 0.0
    %122 = vmatprep.subr.mxu0 0.0
    %123 = vmatpush1.msra.mxu0 0.0
    %124 = vmatprep.subr.mxu0 0.0
    %125 = vmatpush1.msra.mxu0 0.0
    %126 = vmatprep.subr.mxu0 0.0
    %127 = vmatpush1.msra.mxu0 0.0
    %128 = vmatprep.subr.mxu0 0.0
    %129 = vmatpush1.msra.mxu0 0.0
    %130 = vmatprep.subr.mxu0 0.0
    %131 = vmatpush1.msra.mxu0 0.0
    %132 = vmatprep.subr.mxu0 0.0
    %133 = vmatpush1.msra.mxu0 0.0
    %134 = vmatprep.mubr.f32.mxu0 0.0
    %v135 = vand.u32 %v53, 4294901760
    %v136 = vsub.f32 %v53, %v135
    %v137 = vand.u32 %v136, 4294901760
    %v138 = vsub.f32 %v136, %v137
    %v139 = vand.u32 %v138, 4294901760
    %140 = vmatmul.mubr.f32.gmra.mrb[0].mxu0 %v139
    %v141 = vpop.f32.mrb[0].mxu0
    %v142 = vadd.f32 0.0, %v141
    %v143 = vpop.f32.mrb[0].mxu0
    %144 = vdwg.mxu0
    %145 = vmatprep.subr.mxu0 0.0
    %v146 = vand.u32 %v30, 4294901760
    %v147 = vsub.f32 %v30, %v146
    %v148 = vand.u32 %v147, 4294901760
    %v149 = vsub.f32 %v147, %v148
    %v150 = vand.u32 %v149, 4294901760
    %151 = vmatpush1.msra.mxu0 %v150
    %152 = vmatprep.subr.mxu0 0.0
    %v153 = vand.u32 %v31, 4294901760
    %v154 = vsub.f32 %v31, %v153
    %v155 = vand.u32 %v154, 4294901760
    %v156 = vsub.f32 %v154, %v155
    %v157 = vand.u32 %v156, 4294901760
    %158 = vmatpush1.msra.mxu0 %v157
    %159 = vmatprep.subr.mxu0 0.0
    %v160 = vand.u32 %v32, 4294901760
    %v161 = vsub.f32 %v32, %v160
    %v162 = vand.u32 %v161, 4294901760
    %v163 = vsub.f32 %v161, %v162
    %v164 = vand.u32 %v163, 4294901760
    %165 = vmatpush1.msra.mxu0 %v164
    %166 = vmatprep.subr.mxu0 0.0
    %v167 = vand.u32 %v33, 4294901760
    %v168 = vsub.f32 %v33, %v167
    %v169 = vand.u32 %v168, 4294901760
    %v170 = vsub.f32 %v168, %v169
    %v171 = vand.u32 %v170, 4294901760
    %172 = vmatpush1.msra.mxu0 %v171
    %173 = vmatprep.subr.mxu0 0.0
    %v174 = vand.u32 %v34, 4294901760
    %v175 = vsub.f32 %v34, %v174
    %v176 = vand.u32 %v175, 4294901760
    %v177 = vsub.f32 %v175, %v176
    %v178 = vand.u32 %v177, 4294901760
    %179 = vmatpush1.msra.mxu0 %v178
    %180 = vmatprep.subr.mxu0 0.0
    %v181 = vand.u32 %v35, 4294901760
    %v182 = vsub.f32 %v35, %v181
    %v183 = vand.u32 %v182, 4294901760
    %v184 = vsub.f32 %v182, %v183
    %v185 = vand.u32 %v184, 4294901760
    %186 = vmatpush1.msra.mxu0 %v185
    %187 = vmatprep.subr.mxu0 0.0
    %v188 = vand.u32 %v36, 4294901760
    %v189 = vsub.f32 %v36, %v188
    %v190 = vand.u32 %v189, 4294901760
    %v191 = vsub.f32 %v189, %v190
    %v192 = vand.u32 %v191, 4294901760
    %193 = vmatpush1.msra.mxu0 %v192
    %194 = vmatprep.subr.mxu0 0.0
    %v195 = vand.u32 %v37, 4294901760
    %v196 = vsub.f32 %v37, %v195
    %v197 = vand.u32 %v196, 4294901760
    %v198 = vsub.f32 %v196, %v197
    %v199 = vand.u32 %v198, 4294901760
    %200 = vmatpush1.msra.mxu0 %v199
    %201 = vmatprep.subr.mxu0 0.0
    %v202 = vand.u32 %v38, 4294901760
    %v203 = vsub.f32 %v38, %v202
    %v204 = vand.u32 %v203, 4294901760
    %v205 = vsub.f32 %v203, %v204
    %v206 = vand.u32 %v205, 4294901760
    %207 = vmatpush1.msra.mxu0 %v206
    %208 = vmatprep.subr.mxu0 0.0
    %v209 = vand.u32 %v39, 4294901760
    %v210 = vsub.f32 %v39, %v209
    %v211 = vand.u32 %v210, 4294901760
    %v212 = vsub.f32 %v210, %v211
    %v213 = vand.u32 %v212, 4294901760
    %214 = vmatpush1.msra.mxu0 %v213
    %215 = vmatprep.subr.mxu0 0.0
    %v216 = vand.u32 %v40, 4294901760
    %v217 = vsub.f32 %v40, %v216
    %v218 = vand.u32 %v217, 4294901760
    %v219 = vsub.f32 %v217, %v218
    %v220 = vand.u32 %v219, 4294901760
    %221 = vmatpush1.msra.mxu0 %v220
    %222 = vmatprep.subr.mxu0 0.0
    %v223 = vand.u32 %v41, 4294901760
    %v224 = vsub.f32 %v41, %v223
    %v225 = vand.u32 %v224, 4294901760
    %v226 = vsub.f32 %v224, %v225
    %v227 = vand.u32 %v226, 4294901760
    %228 = vmatpush1.msra.mxu0 %v227
    %229 = vmatprep.subr.mxu0 0.0
    %v230 = vand.u32 %v42, 4294901760
    %v231 = vsub.f32 %v42, %v230
    %v232 = vand.u32 %v231, 4294901760
    %v233 = vsub.f32 %v231, %v232
    %v234 = vand.u32 %v233, 4294901760
    %235 = vmatpush1.msra.mxu0 %v234
    %236 = vmatprep.subr.mxu0 0.0
    %v237 = vand.u32 %v43, 4294901760
    %v238 = vsub.f32 %v43, %v237
    %v239 = vand.u32 %v238, 4294901760
    %v240 = vsub.f32 %v238, %v239
    %v241 = vand.u32 %v240, 4294901760
    %242 = vmatpush1.msra.mxu0 %v241
    %243 = vmatprep.subr.mxu0 0.0
    %v244 = vand.u32 %v44, 4294901760
    %v245 = vsub.f32 %v44, %v244
    %v246 = vand.u32 %v245, 4294901760
    %v247 = vsub.f32 %v245, %v246
    %v248 = vand.u32 %v247, 4294901760
    %249 = vmatpush1.msra.mxu0 %v248
    %250 = vmatprep.subr.mxu0 0.0
    %v251 = vand.u32 %v45, 4294901760
    %v252 = vsub.f32 %v45, %v251
    %v253 = vand.u32 %v252, 4294901760
    %v254 = vsub.f32 %v252, %v253
    %v255 = vand.u32 %v254, 4294901760
    %256 = vmatpush1.msra.mxu0 %v255
    %257 = vmatprep.subr.mxu0 0.0
    %258 = vmatpush1.msra.mxu0 0.0
    %259 = vmatprep.subr.mxu0 0.0
    %260 = vmatpush1.msra.mxu0 0.0
    %261 = vmatprep.subr.mxu0 0.0
    %262 = vmatpush1.msra.mxu0 0.0
    %263 = vmatprep.subr.mxu0 0.0
    %264 = vmatpush1.msra.mxu0 0.0
    %265 = vmatprep.subr.mxu0 0.0
    %266 = vmatpush1.msra.mxu0 0.0
    %267 = vmatprep.subr.mxu0 0.0
    %268 = vmatpush1.msra.mxu0 0.0
    %269 = vmatprep.subr.mxu0 0.0
    %270 = vmatpush1.msra.mxu0 0.0
    %271 = vmatprep.subr.mxu0 0.0
    %272 = vmatpush1.msra.mxu0 0.0
    %273 = vmatprep.subr.mxu0 0.0
    %274 = vmatpush1.msra.mxu0 0.0
    %275 = vmatprep.subr.mxu0 0.0
    %276 = vmatpush1.msra.mxu0 0.0
    %277 = vmatprep.subr.mxu0 0.0
    %278 = vmatpush1.msra.mxu0 0.0
    %279 = vmatprep.subr.mxu0 0.0
    %280 = vmatpush1.msra.mxu0 0.0
    %281 = vmatprep.subr.mxu0 0.0
    %282 = vmatpush1.msra.mxu0 0.0
    %283 = vmatprep.subr.mxu0 0.0
    %284 = vmatpush1.msra.mxu0 0.0
    %285 = vmatprep.subr.mxu0 0.0
    %286 = vmatpush1.msra.mxu0 0.0
    %287 = vmatprep.subr.mxu0 0.0
    %288 = vmatpush1.msra.mxu0 0.0
    %289 = vmatprep.mubr.f32.mxu0 0.0
    %v290 = vand.u32 %v53, 4294901760
    %291 = vmatmul.mubr.f32.gmra.mrb[0].mxu0 %v290
    %v292 = vpop.f32.mrb[0].mxu0
    %v293 = vadd.f32 %v142, %v292
    %v294 = vpop.f32.mrb[0].mxu0
    %295 = vdwg.mxu0
    %296 = vmatprep.subr.mxu0 0.0
    %v297 = vand.u32 %v30, 4294901760
    %v298 = vsub.f32 %v30, %v297
    %299 = vmatpush1.msra.mxu0 %v298
    %300 = vmatprep.subr.mxu0 0.0
    %v301 = vand.u32 %v31, 4294901760
    %v302 = vsub.f32 %v31, %v301
    %303 = vmatpush1.msra.mxu0 %v302
    %304 = vmatprep.subr.mxu0 0.0
    %v305 = vand.u32 %v32, 4294901760
    %v306 = vsub.f32 %v32, %v305
    %307 = vmatpush1.msra.mxu0 %v306
    %308 = vmatprep.subr.mxu0 0.0
    %v309 = vand.u32 %v33, 4294901760
    %v310 = vsub.f32 %v33, %v309
    %311 = vmatpush1.msra.mxu0 %v310
    %312 = vmatprep.subr.mxu0 0.0
    %v313 = vand.u32 %v34, 4294901760
    %v314 = vsub.f32 %v34, %v313
    %315 = vmatpush1.msra.mxu0 %v314
    %316 = vmatprep.subr.mxu0 0.0
    %v317 = vand.u32 %v35, 4294901760
    %v318 = vsub.f32 %v35, %v317
    %319 = vmatpush1.msra.mxu0 %v318
    %320 = vmatprep.subr.mxu0 0.0
    %v321 = vand.u32 %v36, 4294901760
    %v322 = vsub.f32 %v36, %v321
    %323 = vmatpush1.msra.mxu0 %v322
    %324 = vmatprep.subr.mxu0 0.0
    %v325 = vand.u32 %v37, 4294901760
    %v326 = vsub.f32 %v37, %v325
    %327 = vmatpush1.msra.mxu0 %v326
    %328 = vmatprep.subr.mxu0 0.0
    %v329 = vand.u32 %v38, 4294901760
    %v330 = vsub.f32 %v38, %v329
    %331 = vmatpush1.msra.mxu0 %v330
    %332 = vmatprep.subr.mxu0 0.0
    %v333 = vand.u32 %v39, 4294901760
    %v334 = vsub.f32 %v39, %v333
    %335 = vmatpush1.msra.mxu0 %v334
    %336 = vmatprep.subr.mxu0 0.0
    %v337 = vand.u32 %v40, 4294901760
    %v338 = vsub.f32 %v40, %v337
    %339 = vmatpush1.msra.mxu0 %v338
    %340 = vmatprep.subr.mxu0 0.0
    %v341 = vand.u32 %v41, 4294901760
    %v342 = vsub.f32 %v41, %v341
    %343 = vmatpush1.msra.mxu0 %v342
    %344 = vmatprep.subr.mxu0 0.0
    %v345 = vand.u32 %v42, 4294901760
    %v346 = vsub.f32 %v42, %v345
    %347 = vmatpush1.msra.mxu0 %v346
    %348 = vmatprep.subr.mxu0 0.0
    %v349 = vand.u32 %v43, 4294901760
    %v350 = vsub.f32 %v43, %v349
    %351 = vmatpush1.msra.mxu0 %v350
    %352 = vmatprep.subr.mxu0 0.0
    %v353 = vand.u32 %v44, 4294901760
    %v354 = vsub.f32 %v44, %v353
    %355 = vmatpush1.msra.mxu0 %v354
    %356 = vmatprep.subr.mxu0 0.0
    %v357 = vand.u32 %v45, 4294901760
    %v358 = vsub.f32 %v45, %v357
    %359 = vmatpush1.msra.mxu0 %v358
    %360 = vmatprep.subr.mxu0 0.0
    %361 = vmatpush1.msra.mxu0 0.0
    %362 = vmatprep.subr.mxu0 0.0
    %363 = vmatpush1.msra.mxu0 0.0
    %364 = vmatprep.subr.mxu0 0.0
    %365 = vmatpush1.msra.mxu0 0.0
    %366 = vmatprep.subr.mxu0 0.0
    %367 = vmatpush1.msra.mxu0 0.0
    %368 = vmatprep.subr.mxu0 0.0
    %369 = vmatpush1.msra.mxu0 0.0
    %370 = vmatprep.subr.mxu0 0.0
    %371 = vmatpush1.msra.mxu0 0.0
    %372 = vmatprep.subr.mxu0 0.0
    %373 = vmatpush1.msra.mxu0 0.0
    %374 = vmatprep.subr.mxu0 0.0
    %375 = vmatpush1.msra.mxu0 0.0
    %376 = vmatprep.subr.mxu0 0.0
    %377 = vmatpush1.msra.mxu0 0.0
    %378 = vmatprep.subr.mxu0 0.0
    %379 = vmatpush1.msra.mxu0 0.0
    %380 = vmatprep.subr.mxu0 0.0
    %381 = vmatpush1.msra.mxu0 0.0
    %382 = vmatprep.subr.mxu0 0.0
    %383 = vmatpush1.msra.mxu0 0.0
    %384 = vmatprep.subr.mxu0 0.0
    %385 = vmatpush1.msra.mxu0 0.0
    %386 = vmatprep.subr.mxu0 0.0
    %387 = vmatpush1.msra.mxu0 0.0
    %388 = vmatprep.subr.mxu0 0.0
    %389 = vmatpush1.msra.mxu0 0.0
    %390 = vmatprep.subr.mxu0 0.0
    %391 = vmatpush1.msra.mxu0 0.0
    %392 = vmatprep.mubr.f32.mxu0 0.0
    %v393 = vand.u32 %v53, 4294901760
    %v394 = vsub.f32 %v53, %v393
    %395 = vmatmul.mubr.f32.gmra.mrb[0].mxu0 %v394
    %v396 = vpop.f32.mrb[0].mxu0
    %v397 = vadd.f32 %v293, %v396
    %v398 = vpop.f32.mrb[0].mxu0
    %399 = vdwg.mxu0
    %400 = vmatprep.subr.mxu0 0.0
    %v401 = vand.u32 %v30, 4294901760
    %402 = vmatpush1.msra.mxu0 %v401
    %403 = vmatprep.subr.mxu0 0.0
    %v404 = vand.u32 %v31, 4294901760
    %405 = vmatpush1.msra.mxu0 %v404
    %406 = vmatprep.subr.mxu0 0.0
    %v407 = vand.u32 %v32, 4294901760
    %408 = vmatpush1.msra.mxu0 %v407
    %409 = vmatprep.subr.mxu0 0.0
    %v410 = vand.u32 %v33, 4294901760
    %411 = vmatpush1.msra.mxu0 %v410
    %412 = vmatprep.subr.mxu0 0.0
    %v413 = vand.u32 %v34, 4294901760
    %414 = vmatpush1.msra.mxu0 %v413
    %415 = vmatprep.subr.mxu0 0.0
    %v416 = vand.u32 %v35, 4294901760
    %417 = vmatpush1.msra.mxu0 %v416
    %418 = vmatprep.subr.mxu0 0.0
    %v419 = vand.u32 %v36, 4294901760
    %420 = vmatpush1.msra.mxu0 %v419
    %421 = vmatprep.subr.mxu0 0.0
    %v422 = vand.u32 %v37, 4294901760
    %423 = vmatpush1.msra.mxu0 %v422
    %424 = vmatprep.subr.mxu0 0.0
    %v425 = vand.u32 %v38, 4294901760
    %426 = vmatpush1.msra.mxu0 %v425
    %427 = vmatprep.subr.mxu0 0.0
    %v428 = vand.u32 %v39, 4294901760
    %429 = vmatpush1.msra.mxu0 %v428
    %430 = vmatprep.subr.mxu0 0.0
    %v431 = vand.u32 %v40, 4294901760
    %432 = vmatpush1.msra.mxu0 %v431
    %433 = vmatprep.subr.mxu0 0.0
    %v434 = vand.u32 %v41, 4294901760
    %435 = vmatpush1.msra.mxu0 %v434
    %436 = vmatprep.subr.mxu0 0.0
    %v437 = vand.u32 %v42, 4294901760
    %438 = vmatpush1.msra.mxu0 %v437
    %439 = vmatprep.subr.mxu0 0.0
    %v440 = vand.u32 %v43, 4294901760
    %441 = vmatpush1.msra.mxu0 %v440
    %442 = vmatprep.subr.mxu0 0.0
    %v443 = vand.u32 %v44, 4294901760
    %444 = vmatpush1.msra.mxu0 %v443
    %445 = vmatprep.subr.mxu0 0.0
    %v446 = vand.u32 %v45, 4294901760
    %447 = vmatpush1.msra.mxu0 %v446
    %448 = vmatprep.subr.mxu0 0.0
    %449 = vmatpush1.msra.mxu0 0.0
    %450 = vmatprep.subr.mxu0 0.0
    %451 = vmatpush1.msra.mxu0 0.0
    %452 = vmatprep.subr.mxu0 0.0
    %453 = vmatpush1.msra.mxu0 0.0
    %454 = vmatprep.subr.mxu0 0.0
    %455 = vmatpush1.msra.mxu0 0.0
    %456 = vmatprep.subr.mxu0 0.0
    %457 = vmatpush1.msra.mxu0 0.0
    %458 = vmatprep.subr.mxu0 0.0
    %459 = vmatpush1.msra.mxu0 0.0
    %460 = vmatprep.subr.mxu0 0.0
    %461 = vmatpush1.msra.mxu0 0.0
    %462 = vmatprep.subr.mxu0 0.0
    %463 = vmatpush1.msra.mxu0 0.0
    %464 = vmatprep.subr.mxu0 0.0
    %465 = vmatpush1.msra.mxu0 0.0
    %466 = vmatprep.subr.mxu0 0.0
    %467 = vmatpush1.msra.mxu0 0.0
    %468 = vmatprep.subr.mxu0 0.0
    %469 = vmatpush1.msra.mxu0 0.0
    %470 = vmatprep.subr.mxu0 0.0
    %471 = vmatpush1.msra.mxu0 0.0
    %472 = vmatprep.subr.mxu0 0.0
    %473 = vmatpush1.msra.mxu0 0.0
    %474 = vmatprep.subr.mxu0 0.0
    %475 = vmatpush1.msra.mxu0 0.0
    %476 = vmatprep.subr.mxu0 0.0
    %477 = vmatpush1.msra.mxu0 0.0
    %478 = vmatprep.subr.mxu0 0.0
    %479 = vmatpush1.msra.mxu0 0.0
    %480 = vmatprep.mubr.f32.mxu0 0.0
    %v481 = vand.u32 %v53, 4294901760
    %v482 = vsub.f32 %v53, %v481
    %v483 = vand.u32 %v482, 4294901760
    %484 = vmatmul.mubr.f32.gmra.mrb[0].mxu0 %v483
    %v485 = vpop.f32.mrb[0].mxu0
    %v486 = vadd.f32 %v397, %v485
    %v487 = vpop.f32.mrb[0].mxu0
    %488 = vdwg.mxu0
    %489 = vmatprep.subr.mxu0 0.0
    %v490 = vand.u32 %v30, 4294901760
    %v491 = vsub.f32 %v30, %v490
    %v492 = vand.u32 %v491, 4294901760
    %493 = vmatpush1.msra.mxu0 %v492
    %494 = vmatprep.subr.mxu0 0.0
    %v495 = vand.u32 %v31, 4294901760
    %v496 = vsub.f32 %v31, %v495
    %v497 = vand.u32 %v496, 4294901760
    %498 = vmatpush1.msra.mxu0 %v497
    %499 = vmatprep.subr.mxu0 0.0
    %v500 = vand.u32 %v32, 4294901760
    %v501 = vsub.f32 %v32, %v500
    %v502 = vand.u32 %v501, 4294901760
    %503 = vmatpush1.msra.mxu0 %v502
    %504 = vmatprep.subr.mxu0 0.0
    %v505 = vand.u32 %v33, 4294901760
    %v506 = vsub.f32 %v33, %v505
    %v507 = vand.u32 %v506, 4294901760
    %508 = vmatpush1.msra.mxu0 %v507
    %509 = vmatprep.subr.mxu0 0.0
    %v510 = vand.u32 %v34, 4294901760
    %v511 = vsub.f32 %v34, %v510
    %v512 = vand.u32 %v511, 4294901760
    %513 = vmatpush1.msra.mxu0 %v512
    %514 = vmatprep.subr.mxu0 0.0
    %v515 = vand.u32 %v35, 4294901760
    %v516 = vsub.f32 %v35, %v515
    %v517 = vand.u32 %v516, 4294901760
    %518 = vmatpush1.msra.mxu0 %v517
    %519 = vmatprep.subr.mxu0 0.0
    %v520 = vand.u32 %v36, 4294901760
    %v521 = vsub.f32 %v36, %v520
    %v522 = vand.u32 %v521, 4294901760
    %523 = vmatpush1.msra.mxu0 %v522
    %524 = vmatprep.subr.mxu0 0.0
    %v525 = vand.u32 %v37, 4294901760
    %v526 = vsub.f32 %v37, %v525
    %v527 = vand.u32 %v526, 4294901760
    %528 = vmatpush1.msra.mxu0 %v527
    %529 = vmatprep.subr.mxu0 0.0
    %v530 = vand.u32 %v38, 4294901760
    %v531 = vsub.f32 %v38, %v530
    %v532 = vand.u32 %v531, 4294901760
    %533 = vmatpush1.msra.mxu0 %v532
    %534 = vmatprep.subr.mxu0 0.0
    %v535 = vand.u32 %v39, 4294901760
    %v536 = vsub.f32 %v39, %v535
    %v537 = vand.u32 %v536, 4294901760
    %538 = vmatpush1.msra.mxu0 %v537
    %539 = vmatprep.subr.mxu0 0.0
    %v540 = vand.u32 %v40, 4294901760
    %v541 = vsub.f32 %v40, %v540
    %v542 = vand.u32 %v541, 4294901760
    %543 = vmatpush1.msra.mxu0 %v542
    %544 = vmatprep.subr.mxu0 0.0
    %v545 = vand.u32 %v41, 4294901760
    %v546 = vsub.f32 %v41, %v545
    %v547 = vand.u32 %v546, 4294901760
    %548 = vmatpush1.msra.mxu0 %v547
    %549 = vmatprep.subr.mxu0 0.0
    %v550 = vand.u32 %v42, 4294901760
    %v551 = vsub.f32 %v42, %v550
    %v552 = vand.u32 %v551, 4294901760
    %553 = vmatpush1.msra.mxu0 %v552
    %554 = vmatprep.subr.mxu0 0.0
    %v555 = vand.u32 %v43, 4294901760
    %v556 = vsub.f32 %v43, %v555
    %v557 = vand.u32 %v556, 4294901760
    %558 = vmatpush1.msra.mxu0 %v557
    %559 = vmatprep.subr.mxu0 0.0
    %v560 = vand.u32 %v44, 4294901760
    %v561 = vsub.f32 %v44, %v560
    %v562 = vand.u32 %v561, 4294901760
    %563 = vmatpush1.msra.mxu0 %v562
    %564 = vmatprep.subr.mxu0 0.0
    %v565 = vand.u32 %v45, 4294901760
    %v566 = vsub.f32 %v45, %v565
    %v567 = vand.u32 %v566, 4294901760
    %568 = vmatpush1.msra.mxu0 %v567
    %569 = vmatprep.subr.mxu0 0.0
    %570 = vmatpush1.msra.mxu0 0.0
    %571 = vmatprep.subr.mxu0 0.0
    %572 = vmatpush1.msra.mxu0 0.0
    %573 = vmatprep.subr.mxu0 0.0
    %574 = vmatpush1.msra.mxu0 0.0
    %575 = vmatprep.subr.mxu0 0.0
    %576 = vmatpush1.msra.mxu0 0.0
    %577 = vmatprep.subr.mxu0 0.0
    %578 = vmatpush1.msra.mxu0 0.0
    %579 = vmatprep.subr.mxu0 0.0
    %580 = vmatpush1.msra.mxu0 0.0
    %581 = vmatprep.subr.mxu0 0.0
    %582 = vmatpush1.msra.mxu0 0.0
    %583 = vmatprep.subr.mxu0 0.0
    %584 = vmatpush1.msra.mxu0 0.0
    %585 = vmatprep.subr.mxu0 0.0
    %586 = vmatpush1.msra.mxu0 0.0
    %587 = vmatprep.subr.mxu0 0.0
    %588 = vmatpush1.msra.mxu0 0.0
    %589 = vmatprep.subr.mxu0 0.0
    %590 = vmatpush1.msra.mxu0 0.0
    %591 = vmatprep.subr.mxu0 0.0
    %592 = vmatpush1.msra.mxu0 0.0
    %593 = vmatprep.subr.mxu0 0.0
    %594 = vmatpush1.msra.mxu0 0.0
    %595 = vmatprep.subr.mxu0 0.0
    %596 = vmatpush1.msra.mxu0 0.0
    %597 = vmatprep.subr.mxu0 0.0
    %598 = vmatpush1.msra.mxu0 0.0
    %599 = vmatprep.subr.mxu0 0.0
    %600 = vmatpush1.msra.mxu0 0.0
    %601 = vmatprep.mubr.f32.mxu0 0.0
    %v602 = vand.u32 %v53, 4294901760
    %603 = vmatmul.mubr.f32.gmra.mrb[0].mxu0 %v602
    %v604 = vpop.f32.mrb[0].mxu0
    %v605 = vadd.f32 %v486, %v604
    %v606 = vpop.f32.mrb[0].mxu0
    %607 = vdwg.mxu0
    %608 = vmatprep.subr.mxu0 0.0
    %v609 = vand.u32 %v30, 4294901760
    %610 = vmatpush1.msra.mxu0 %v609
    %611 = vmatprep.subr.mxu0 0.0
    %v612 = vand.u32 %v31, 4294901760
    %613 = vmatpush1.msra.mxu0 %v612
    %614 = vmatprep.subr.mxu0 0.0
    %v615 = vand.u32 %v32, 4294901760
    %616 = vmatpush1.msra.mxu0 %v615
    %617 = vmatprep.subr.mxu0 0.0
    %v618 = vand.u32 %v33, 4294901760
    %619 = vmatpush1.msra.mxu0 %v618
    %620 = vmatprep.subr.mxu0 0.0
    %v621 = vand.u32 %v34, 4294901760
    %622 = vmatpush1.msra.mxu0 %v621
    %623 = vmatprep.subr.mxu0 0.0
    %v624 = vand.u32 %v35, 4294901760
    %625 = vmatpush1.msra.mxu0 %v624
    %626 = vmatprep.subr.mxu0 0.0
    %v627 = vand.u32 %v36, 4294901760
    %628 = vmatpush1.msra.mxu0 %v627
    %629 = vmatprep.subr.mxu0 0.0
    %v630 = vand.u32 %v37, 4294901760
    %631 = vmatpush1.msra.mxu0 %v630
    %632 = vmatprep.subr.mxu0 0.0
    %v633 = vand.u32 %v38, 4294901760
    %634 = vmatpush1.msra.mxu0 %v633
    %635 = vmatprep.subr.mxu0 0.0
    %v636 = vand.u32 %v39, 4294901760
    %637 = vmatpush1.msra.mxu0 %v636
    %638 = vmatprep.subr.mxu0 0.0
    %v639 = vand.u32 %v40, 4294901760
    %640 = vmatpush1.msra.mxu0 %v639
    %641 = vmatprep.subr.mxu0 0.0
    %v642 = vand.u32 %v41, 4294901760
    %643 = vmatpush1.msra.mxu0 %v642
    %644 = vmatprep.subr.mxu0 0.0
    %v645 = vand.u32 %v42, 4294901760
    %646 = vmatpush1.msra.mxu0 %v645
    %647 = vmatprep.subr.mxu0 0.0
    %v648 = vand.u32 %v43, 4294901760
    %649 = vmatpush1.msra.mxu0 %v648
    %650 = vmatprep.subr.mxu0 0.0
    %v651 = vand.u32 %v44, 4294901760
    %652 = vmatpush1.msra.mxu0 %v651
    %653 = vmatprep.subr.mxu0 0.0
    %v654 = vand.u32 %v45, 4294901760
    %655 = vmatpush1.msra.mxu0 %v654
    %656 = vmatprep.subr.mxu0 0.0
    %657 = vmatpush1.msra.mxu0 0.0
    %658 = vmatprep.subr.mxu0 0.0
    %659 = vmatpush1.msra.mxu0 0.0
    %660 = vmatprep.subr.mxu0 0.0
    %661 = vmatpush1.msra.mxu0 0.0
    %662 = vmatprep.subr.mxu0 0.0
    %663 = vmatpush1.msra.mxu0 0.0
    %664 = vmatprep.subr.mxu0 0.0
    %665 = vmatpush1.msra.mxu0 0.0
    %666 = vmatprep.subr.mxu0 0.0
    %667 = vmatpush1.msra.mxu0 0.0
    %668 = vmatprep.subr.mxu0 0.0
    %669 = vmatpush1.msra.mxu0 0.0
    %670 = vmatprep.subr.mxu0 0.0
    %671 = vmatpush1.msra.mxu0 0.0
    %672 = vmatprep.subr.mxu0 0.0
    %673 = vmatpush1.msra.mxu0 0.0
    %674 = vmatprep.subr.mxu0 0.0
    %675 = vmatpush1.msra.mxu0 0.0
    %676 = vmatprep.subr.mxu0 0.0
    %677 = vmatpush1.msra.mxu0 0.0
    %678 = vmatprep.subr.mxu0 0.0
    %679 = vmatpush1.msra.mxu0 0.0
    %680 = vmatprep.subr.mxu0 0.0
    %681 = vmatpush1.msra.mxu0 0.0
    %682 = vmatprep.subr.mxu0 0.0
    %683 = vmatpush1.msra.mxu0 0.0
    %684 = vmatprep.subr.mxu0 0.0
    %685 = vmatpush1.msra.mxu0 0.0
    %686 = vmatprep.subr.mxu0 0.0
    %687 = vmatpush1.msra.mxu0 0.0
    %688 = vmatprep.mubr.f32.mxu0 0.0
    %v689 = vand.u32 %v53, 4294901760
    %690 = vmatmul.mubr.f32.gmra.mrb[0].mxu0 %v689
    %v691 = vpop.f32.mrb[0].mxu0
    %v692 = vadd.f32 %v605, %v691
    %v693 = vpop.f32.mrb[0].mxu0
    %694 = vdwg.mxu0
    %v695 = vld [vmem:[%s1] sm:$0xff]
    %v696 = vsub.f32 %v695, %v692
    %v697 = vmul.f32 %v696, %v696
    %v698 = vadd.f32 %v697, 0.0
    %699 = vst [vmem:[#allocation5] sm:$0xff] %v698
    // Predicated region
    $region18: #{tpu_custom_call.1} parent=1 // pred_check
      _
    $region19: #{tpu_custom_call.1} parent=1 // pred_check_branch
      %701 = sbr.rel (0) target = $region21
    $region20: #{tpu_custom_call.1} parent=1 // pred_region
      %s703 = ssub.s32 128, 128
      %704 = vsyncadd [#allocation4], %s703
      %s706 = sshll.u32 [#allocation5], 4
      %s707 = int_to_ptr.vmem [resolvable:$true] %s706
      %709 = dma.vmem_to_hbm [thread:$0]  %s707, 128, %s3, [#allocation4]
    $region21: #{tpu_custom_call.1} parent=1 // pred_fallthru
      _
    // Predicated region
    $region22: #{tpu_custom_call.1} parent=1 // pred_check
      _
    $region23: #{tpu_custom_call.1} parent=1 // pred_check_branch
      %711 = sbr.rel (0) target = $region25
    $region24: #{tpu_custom_call.1} parent=1 // pred_region
      %712 = dma.done [#allocation4], 128
    $region25: #{tpu_custom_call.1} parent=1 // pred_fallthru
      _
    %713 = vsyncpa [#allocation3], 1
    %714 = vsyncpa [#allocation4], 1

</llo_original>
